<compile_context>
chip_gen: v5e
topology: v5e:2x2
jax: 0.10.0
libtpu: 0.0.40
codegen_flags: <defaults>
</compile_context>

<pallas_src>
import jax
import jax.numpy as jnp
import numpy as np
from jax.experimental import pallas as pl
from jax.experimental.pallas import tpu as pltpu


# ----------------------------- Pallas kernel -----------------------------

def _scaled_mask_mul_kernel(x_ref, m_ref, o_ref):
    # x_ref: (1, tile_c, H, W) or (1, tile_c, H*W)
    # m_ref: (1, 1,      H, W) or (1, 1,      H*W)   (scale already folded in)
    # Mask broadcasts over the channel axis; single wide vector store.
    o_ref[...] = x_ref[...] * m_ref[...]


# ----------------------------- tiling policy -----------------------------

def _vmem_block_budget_bytes():
    """Byte budget for the live (double-buffered in + out) x blocks."""
    try:
        cap = int(pltpu.get_tpu_info().vmem_capacity_bytes)
    except Exception:
        cap = 64 << 20  # conservative (v7x-sized) fallback
    # live x traffic = 2 buffers * (in + out) * block  ->  keep it <= cap/4,
    # and never above 32 MiB (v5e/v6e have 128 MiB, v7x only 64 MiB).
    return min(cap // 4, 32 << 20)


def _choose_channel_tiling(C, per_channel_bytes, require_mult8):
    """Pick (tile_c, padded_C) so 4 * tile_c * per_channel_bytes <= budget."""
    budget = _vmem_block_budget_bytes()
    max_tc = max(1, budget // (4 * per_channel_bytes))
    if C <= max_tc:
        # Full-C block: always a legal block shape (block dim == array dim).
        return C, C
    n_tiles = -(-C // max_tc)          # cdiv
    tile_c = -(-C // n_tiles)          # balanced tile size
    if require_mult8:
        tile_c = -(-tile_c // 8) * 8   # (8,128) sublane constraint when tiling
    padded_C = tile_c * n_tiles
    return tile_c, padded_C


# ----------------------------- wrappers -----------------------------

def _expand_scaled_mask(keep_flags, patch_size, scale, dtype):
    """(B, np, np) int flags -> (B, 1, H, W) mask with 1/(1-p) folded in."""
    B, npch, _ = keep_flags.shape
    H = npch * patch_size
    m = (keep_flags.astype(jnp.float32) * scale).astype(dtype)
    m = m.reshape(B, npch, 1, npch, 1)
    m = jnp.broadcast_to(m, (B, npch, patch_size, npch, patch_size))
    return m.reshape(B, 1, H, H)


def patch_dropout_pallas(x_nchw, keep_flags, patch_size, p):
    """Training-mode PatchDropout. keep_flags: (B, num_patches, num_patches) int32."""
    B, C, H, W = x_nchw.shape
    assert H == W and H % patch_size == 0
    scale = 1.0 / (1.0 - p)
    itemsize = x_nchw.dtype.itemsize
    per_channel_bytes = H * W * itemsize

    mask = _expand_scaled_mask(keep_flags, patch_size, scale, x_nchw.dtype)  # (B,1,H,W)

    # Layout choice (perf review): lane-dense H*W layout unless C is small /
    # misaligned and W is already lane-wide, in which case put H on sublanes.
    use_4d = (W >= 128) and (C % 8 != 0)

    if use_4d:
        tile_c, Cp = _choose_channel_tiling(C, per_channel_bytes, require_mult8=False)
        xk = x_nchw if Cp == C else jnp.pad(
            x_nchw, ((0, 0), (0, Cp - C), (0, 0), (0, 0)))
        grid = (B, Cp // tile_c)
        x_spec = pl.BlockSpec((1, tile_c, H, W), lambda b, c: (b, c, 0, 0))
        m_spec = pl.BlockSpec((1, 1, H, W), lambda b, c: (b, 0, 0, 0))
        out_shape = jax.ShapeDtypeStruct((B, Cp, H, W), x_nchw.dtype)
        mask_in = mask
    else:
        HW = H * W
        tile_c, Cp = _choose_channel_tiling(C, per_channel_bytes, require_mult8=True)
        xk = x_nchw.reshape(B, C, HW)
        if Cp != C:
            xk = jnp.pad(xk, ((0, 0), (0, Cp - C), (0, 0)))
        grid = (B, Cp // tile_c)
        x_spec = pl.BlockSpec((1, tile_c, HW), lambda b, c: (b, c, 0))
        m_spec = pl.BlockSpec((1, 1, HW), lambda b, c: (b, 0, 0))
        out_shape = jax.ShapeDtypeStruct((B, Cp, HW), x_nchw.dtype)
        mask_in = mask.reshape(B, 1, HW)

    block_bytes = tile_c * per_channel_bytes
    mask_bytes = per_channel_bytes
    needed = 4 * block_bytes + 4 * mask_bytes + (4 << 20)
    vmem_limit = int(min(max(needed, 32 << 20), 64 << 20))

    cost = pl.CostEstimate(
        flops=B * C * H * W,
        transcendentals=0,
        bytes_accessed=(2 * B * C + B) * H * W * itemsize)

    out = pl.pallas_call(
        _scaled_mask_mul_kernel,
        grid=grid,
        in_specs=[x_spec, m_spec],
        out_specs=x_spec,
        out_shape=out_shape,
        compiler_params=pltpu.CompilerParams(
            dimension_semantics=("parallel", "parallel"),
            vmem_limit_bytes=vmem_limit),
        cost_estimate=cost,
    )(xk, mask_in)

    out = out[:, :C]
    if not use_4d:
        out = out.reshape(B, C, H, W)
    return out


def patch_dropout(x_nchw, key, patch_size, p, training=True):
    """Matches PatchDropout.forward: identity unless (training and p > 0)."""
    if (not training) or p <= 0.0:
        return x_nchw
    B, _, H, _ = x_nchw.shape
    npch = H // patch_size
    # Per-patch Bernoulli draw (tiny, B*np^2 scalars) stays in jax.random;
    # expansion / scale / multiply are fused in the Pallas kernel.
    keep_flags = jax.random.bernoulli(
        key, 1.0 - p, (B, npch, npch)).astype(jnp.int32)
    return patch_dropout_pallas(x_nchw, keep_flags, patch_size, p)


# ----------------------------- pure-JAX reference -----------------------------

def patch_dropout_ref(x_nchw, keep_flags, patch_size, p):
    # Mirrors drop_patches(): (B,1,np,1,np,1) -> repeat -> (B,1,H,W), then scale.
    B, C, H, W = x_nchw.shape
    npch = H // patch_size
    m = keep_flags.reshape(B, 1, npch, 1, npch, 1).astype(x_nchw.dtype)
    m = jnp.broadcast_to(m, (B, 1, npch, patch_size, npch, patch_size))
    m = m.reshape(B, 1, H, W)
    return x_nchw * m * (1.0 / (1.0 - p))


# ----------------------------- main -----------------------------

if __name__ == "__main__":
    key = jax.random.PRNGKey(0)
    k1, k2, k3, k4 = jax.random.split(key, 4)

    # --- Case 1: small W (< 128) -> lane-dense (B, C, H*W) layout.
    patch_size, p = 4, 0.5
    x = jax.random.normal(k1, (2, 4, 16, 16), jnp.float32)   # PyTorch-style NCHW
    npch = 16 // patch_size
    flags = jax.random.bernoulli(k2, 1.0 - p, (2, npch, npch)).astype(jnp.int32)
    out = jax.block_until_ready(patch_dropout_pallas(x, flags, patch_size, p))
    ref = patch_dropout_ref(x, flags, patch_size, p)
    assert out.shape == x.shape, out.shape
    np.testing.assert_allclose(np.asarray(out), np.asarray(ref), rtol=1e-6, atol=1e-6)

    # --- Case 2: RGB-like C=3, W >= 128 -> channel-tiled (1, tc, H, W) layout.
    ps2, p2 = 16, 0.25
    x2 = jax.random.normal(k3, (2, 3, 128, 128), jnp.float32)
    npch2 = 128 // ps2
    flags2 = jax.random.bernoulli(k4, 1.0 - p2, (2, npch2, npch2)).astype(jnp.int32)
    out2 = jax.block_until_ready(patch_dropout_pallas(x2, flags2, ps2, p2))
    ref2 = patch_dropout_ref(x2, flags2, ps2, p2)
    assert out2.shape == x2.shape, out2.shape
    np.testing.assert_allclose(np.asarray(out2), np.asarray(ref2), rtol=1e-6, atol=1e-6)

    # --- Eval path (and p == 0): identity, matching the PyTorch module.
    out_eval = jax.block_until_ready(patch_dropout(x, k2, patch_size, p, training=False))
    np.testing.assert_allclose(np.asarray(out_eval), np.asarray(x))

    print("KERNEL_OK")
</pallas_src>

<mosaic_0001>
module attributes {stable_mosaic.version = 11 : i64} {
  func.func @_scaled_mask_mul_kernel(%arg0: i32, %arg1: i32, %arg2: memref<1x4x256xf32, #tpu.memory_space<vmem>>, %arg3: memref<1x1x256xf32, #tpu.memory_space<vmem>>, %arg4: memref<1x4x256xf32, #tpu.memory_space<vmem>>) attributes {dimension_semantics = [#tpu.dimension_semantics<parallel>, #tpu.dimension_semantics<parallel>], iteration_bounds = array<i64: 2, 1>, scalar_prefetch = 0 : i64, scratch_operands = 0 : i64, tpu.core_type = #tpu.core_type<tc>, window_params = [{transform_indices = @transform_0, window_bounds = array<i64: 1, 4, 256>}, {transform_indices = @transform_1, window_bounds = array<i64: 1, 1, 256>}, {transform_indices = @transform_2, window_bounds = array<i64: 1, 4, 256>}]} {
    %c0 = arith.constant 0 : index
    %c0_0 = arith.constant 0 : index
    %c0_1 = arith.constant 0 : index
    %0 = vector.load %arg2[%c0, %c0_0, %c0_1] : memref<1x4x256xf32, #tpu.memory_space<vmem>>, vector<1x4x256xf32>
    %c0_2 = arith.constant 0 : index
    %c0_3 = arith.constant 0 : index
    %c0_4 = arith.constant 0 : index
    %1 = vector.load %arg3[%c0_2, %c0_3, %c0_4] : memref<1x1x256xf32, #tpu.memory_space<vmem>>, vector<1x1x256xf32>
    %2 = vector.broadcast %1 : vector<1x1x256xf32> to vector<1x4x256xf32>
    %3 = arith.mulf %0, %2 : vector<1x4x256xf32>
    %c0_5 = arith.constant 0 : index
    %c0_6 = arith.constant 0 : index
    %c0_7 = arith.constant 0 : index
    %4 = vector.load %arg4[%c0_5, %c0_6, %c0_7] : memref<1x4x256xf32, #tpu.memory_space<vmem>>, vector<1x4x256xf32>
    tpu.vector_store %arg4[%c0_5, %c0_6, %c0_7], %3 {strides = array<i32>} : memref<1x4x256xf32, #tpu.memory_space<vmem>>, vector<1x4x256xf32>,
    return
  }
  func.func @transform_0(%arg0: i32, %arg1: i32) -> (i32, i32, i32) {
    %c0_i32 = arith.constant 0 : i32
    %c0_i32_0 = arith.constant 0 : i32
    return %arg0, %arg1, %c0_i32 : i32, i32, i32
  }
  func.func @transform_1(%arg0: i32, %arg1: i32) -> (i32, i32, i32) {
    %c0_i32 = arith.constant 0 : i32
    %c0_i32_0 = arith.constant 0 : i32
    %c0_i32_1 = arith.constant 0 : i32
    return %arg0, %c0_i32, %c0_i32_0 : i32, i32, i32
  }
  func.func @transform_2(%arg0: i32, %arg1: i32) -> (i32, i32, i32) {
    %c0_i32 = arith.constant 0 : i32
    %c0_i32_0 = arith.constant 0 : i32
    return %arg0, %arg1, %c0_i32 : i32, i32, i32
  }
}

</mosaic_0001>

<llo_original>
// kernel: tpu_custom_call.1
$region0: #{tpu_custom_call.1}
  #allocation0 [shape = 'u32[]', space=smem, size = 0x4, offset = 0x4, fixed_abs, tag = 'smem constant byte address 0x4 - core index']
  #allocation1 [shape = 'u32[72,128]{1,0:T(1,128)}', space=vmem, size = 0x9000, scoped, tag = 'internal scratch']
  %s0 = inlined_call_operand.hbm [shape: f32[2,4,256], index: 0, kind: input, shape index: {}]
  %s1 = inlined_call_operand.hbm [shape: f32[2,1,256], index: 1, kind: input, shape index: {}]
  %s2 = inlined_call_operand.hbm [shape: f32[2,4,256], index: 2, kind: output, shape index: {}]
  %s3 = sld [smem:[#allocation0]]
  $region49: #{tpu_custom_call.1} parent=0
    _
  %s5 = ssub.s32 1, %s3
  %s6 = scalar_select 0, %s5, %s3
  $region1: #{tpu_custom_call.1} parent=0
    #allocation2 [shape = 'u8[8192]{0}', space=vmem, size = 0x2000, scoped, tag = 'input window, operand 0']
    #allocation3 [shape = 's32[2]{0}', space=sflag, size = 0x8, scoped, tag = 'scoped memory for tpu_custom_call.1']
    #allocation4 [shape = 's32[2]{0}', space=sflag, size = 0x8, scoped, tag = 'scoped memory for tpu_custom_call.1']
    #allocation5 [shape = 'u8[2048]{0}', space=vmem, size = 0x800, scoped, tag = 'input window, operand 1']
    #allocation6 [shape = 's32[2]{0}', space=sflag, size = 0x8, scoped, tag = 'scoped memory for tpu_custom_call.1']
    #allocation7 [shape = 'u8[8192]{0}', space=vmem, size = 0x2000, scoped, tag = 'output window, operand 0']
    %7 = vsyncpa [#allocation3], 0
    %s8 = scalar_lea.sflag [#allocation3], 1
    %9 = vsyncpa %s8, 0
    %10 = vsyncpa [#allocation6], 0
    %s11 = scalar_lea.sflag [#allocation6], 1
    %12 = vsyncpa %s11, 0
    %13 = vsyncpa [#allocation4], 0
    %s14 = scalar_lea.sflag [#allocation4], 1
    %15 = vsyncpa %s14, 0
    loop: start=0, step=1, limit=4
    $region2: #{tpu_custom_call.1} parent=1 // loop_pre_header
      _
    $region3: #{tpu_custom_call.1} parent=1 // loop_header
      %s17 = sphi 0, %s21
      %p18 = scmp.ge.s32.totalorder %s17, 4
      %s24 = sphi 0, %s36
      %s25 = sphi 0, %s32
      %s26 = sphi 0, %s24
      %s27 = sphi 0, %s25
      %s28 = sphi 0, %s26
      %s29 = sphi 0, %s27
      %s41 = sphi 0, %s43
      %s44 = sphi 0, %s41
      %s45 = sphi 0, %s44
      %s61 = sphi 0, %s45
      %s67 = sphi 0, %s69
      %s70 = sphi 0, %s67
      %s71 = sphi 0, %s70
      %s87 = sphi 0, %s71
      %s95 = sphi 0, %s97
      %s98 = sphi 0, %s95
      %s99 = sphi 0, %s98
      %s115 = sphi 0, %s99
    $region4: #{tpu_custom_call.1} parent=1 // loop_header_branch
      %20 = sbr.rel (%p18) target = $region8
    $region5: #{tpu_custom_call.1} parent=1 // loop_body
      %s22 = ssub.s32 %s17, 1
      %s23 = ssub.s32 %s17, 2
      %s30 = sadd.s32 1, %s25
      %p31 = scmp.ge.s32.totalorder %s30, 1
      %s32 = scalar_select %p31, 0, %s30
      %s33 = sadd.s32 1, %s24
      %s34 = scalar_select %p31, %s33, %s24
      %p35 = scmp.ge.s32.totalorder %s34, 2
      %s36 = scalar_select %p35, 0, %s34
      %s37 = ssub.s32 %s24, %s36
      %s38 = ssub.s32 %s25, %s32
      %s39 = sor.u32 %s37, %s38
      %p40 = scmp.eq.s32.totalorder %s39, 0
      %s42 = sadd.s32 %s41, 1
      %s43 = scalar_select %p40, %s41, %s42
      %p46 = pneg %p40
      %p47 = scmp.eq.s32.totalorder %s17, 1
      %p48 = por %p46, %p47
      %p49 = scmp.ne.s32.totalorder %s41, %s44
      %p50 = scmp.eq.s32.totalorder %s17, 0
      %p51 = por %p49, %p50
      %p52 = scmp.ne.s32.totalorder %s41, %s44
      %p53 = scmp.eq.s32.totalorder %s22, 1
      %p54 = por %p52, %p53
      %p55 = scmp.ne.s32.totalorder %s44, %s45
      %p56 = scmp.eq.s32.totalorder %s22, 0
      %p57 = por %p55, %p56
      %p58 = scmp.ne.s32.totalorder %s44, %s45
      %p59 = scmp.eq.s32.totalorder %s23, 1
      %p60 = por %p58, %p59
      %p62 = scmp.ne.s32.totalorder %s45, %s61
      %p63 = scmp.eq.s32.totalorder %s23, 0
      %p64 = por %p62, %p63
      %s65 = ssub.s32 %s24, %s36
      %p66 = scmp.eq.s32.totalorder %s65, 0
      %s68 = sadd.s32 %s67, 1
      %s69 = scalar_select %p66, %s67, %s68
      %p72 = pneg %p66
      %p73 = scmp.eq.s32.totalorder %s17, 1
      %p74 = por %p72, %p73
      %p75 = scmp.ne.s32.totalorder %s67, %s70
      %p76 = scmp.eq.s32.totalorder %s17, 0
      %p77 = por %p75, %p76
      %p78 = scmp.ne.s32.totalorder %s67, %s70
      %p79 = scmp.eq.s32.totalorder %s22, 1
      %p80 = por %p78, %p79
      %p81 = scmp.ne.s32.totalorder %s70, %s71
      %p82 = scmp.eq.s32.totalorder %s22, 0
      %p83 = por %p81, %p82
      %p84 = scmp.ne.s32.totalorder %s70, %s71
      %p85 = scmp.eq.s32.totalorder %s23, 1
      %p86 = por %p84, %p85
      %p88 = scmp.ne.s32.totalorder %s71, %s87
      %p89 = scmp.eq.s32.totalorder %s23, 0
      %p90 = por %p88, %p89
      %s91 = ssub.s32 %s24, %s36
      %s92 = ssub.s32 %s25, %s32
      %s93 = sor.u32 %s91, %s92
      %p94 = scmp.eq.s32.totalorder %s93, 0
      %s96 = sadd.s32 %s95, 1
      %s97 = scalar_select %p94, %s95, %s96
      %p100 = pneg %p94
      %p101 = scmp.eq.s32.totalorder %s17, 1
      %p102 = por %p100, %p101
      %p103 = scmp.ne.s32.totalorder %s95, %s98
      %p104 = scmp.eq.s32.totalorder %s17, 0
      %p105 = por %p103, %p104
      %p106 = scmp.ne.s32.totalorder %s95, %s98
      %p107 = scmp.eq.s32.totalorder %s22, 1
      %p108 = por %p106, %p107
      %p109 = scmp.ne.s32.totalorder %s98, %s99
      %p110 = scmp.eq.s32.totalorder %s22, 0
      %p111 = por %p109, %p110
      %p112 = scmp.ne.s32.totalorder %s98, %s99
      %p113 = scmp.eq.s32.totalorder %s23, 1
      %p114 = por %p112, %p113
      %p116 = scmp.ne.s32.totalorder %s99, %s115
      %p117 = scmp.eq.s32.totalorder %s23, 0
      %p118 = por %p116, %p117
      %p119 = scmp.le.s32.totalorder 1, %s17
      %p120 = scmp.lt.s32.totalorder %s17, 3
      %p121 = pnand %p119, %p120
      %p122 = pneg %p121
      // Predicated region
      $region9: #{tpu_custom_call.1} parent=5 // pred_check
        _
      $region10: #{tpu_custom_call.1} parent=5 // pred_check_branch
        %124 = sbr.rel (%p121) target = $region12
      $region11: #{tpu_custom_call.1} parent=5 // pred_region
        %s125 = ssub.s32 %s17, 1
      $region12: #{tpu_custom_call.1} parent=5 // pred_fallthru
        _
      %p126 = scmp.lt.s32.totalorder %s17, 2
      // Predicated region
      $region13: #{tpu_custom_call.1} parent=5 // pred_check
        %p127 = pneg %p126
      $region14: #{tpu_custom_call.1} parent=5 // pred_check_branch
        %129 = sbr.rel (%p127) target = $region16
      $region15: #{tpu_custom_call.1} parent=5 // pred_region
        // Predicated region
        $region17: #{tpu_custom_call.1} parent=15 // pred_check
          %p130 = pneg %p51
        $region18: #{tpu_custom_call.1} parent=15 // pred_check_branch
          %132 = sbr.rel (%p130) target = $region20
        $region19: #{tpu_custom_call.1} parent=15 // pred_region
          %s133 = sand.u32 %s41, 1
          %s134 = scalar_lea.sflag [#allocation3], %s133
          %s135 = sand.u32 %s41, 1
          %s136 = smul.addr %s135, 8
          %s137 = scalar_lea.vmem [#allocation2], %s136
          %139 = vsyncadd %s134, 0
          %s140 = smul.addr %s25, 2
          %s141 = smul.addr %s24, 2
          %s142 = sadd.s32 %s140, %s141
          %s143 = smul.addr %s142, 4
          %s144 = scalar_lea.hbm %s0, %s143
          %s146 = sshll.u32 %s144, 4
          %s147 = int_to_ptr.hbm [resolvable:$true] %s146
          %s148 = sshll.u32 %s137, 4
          %s149 = int_to_ptr.vmem [resolvable:$true] %s148
          %151 = dma.hbm_to_vmem [thread:$0]  %s147, 128, %s149, %s134
        $region20: #{tpu_custom_call.1} parent=15 // pred_fallthru
          _
        // Predicated region
        $region21: #{tpu_custom_call.1} parent=15 // pred_check
          %p152 = pneg %p77
        $region22: #{tpu_custom_call.1} parent=15 // pred_check_branch
          %154 = sbr.rel (%p152) target = $region24
        $region23: #{tpu_custom_call.1} parent=15 // pred_region
          %s155 = sand.u32 %s67, 1
          %s156 = scalar_lea.sflag [#allocation6], %s155
          %s157 = sand.u32 %s67, 1
          %s158 = smul.addr %s157, 2
          %s159 = scalar_lea.vmem [#allocation5], %s158
          %161 = vsyncadd %s156, 0
          %s162 = smul.addr %s24, 2
          %s163 = scalar_lea.hbm %s1, %s162
          %s165 = sshll.u32 %s163, 4
          %s166 = int_to_ptr.hbm [resolvable:$true] %s165
          %s167 = sshll.u32 %s159, 4
          %s168 = int_to_ptr.vmem [resolvable:$true] %s167
          %170 = dma.hbm_to_vmem [thread:$0]  %s166, 32, %s168, %s156
        $region24: #{tpu_custom_call.1} parent=15 // pred_fallthru
          _
      $region16: #{tpu_custom_call.1} parent=5 // pred_fallthru
        _
      %p171 = scmp.le.s32.totalorder 1, %s17
      %p172 = scmp.lt.s32.totalorder %s17, 3
      %p173 = pnand %p171, %p172
      %p174 = pneg %p173
      // Predicated region
      $region25: #{tpu_custom_call.1} parent=5 // pred_check
        _
      $region26: #{tpu_custom_call.1} parent=5 // pred_check_branch
        %176 = sbr.rel (%p173) target = $region28
      $region27: #{tpu_custom_call.1} parent=5 // pred_region
        %s177 = ssub.s32 %s17, 1
        %s178 = sand.u32 %s44, 1
        %s179 = scalar_lea.sflag [#allocation3], %s178
        %s180 = sand.u32 %s44, 1
        %s181 = smul.addr %s180, 8
        %s182 = scalar_lea.vmem [#allocation2], %s181
        // Predicated region
        $region29: #{tpu_custom_call.1} parent=27 // pred_check
          %p183 = pneg %p57
        $region30: #{tpu_custom_call.1} parent=27 // pred_check_branch
          %185 = sbr.rel (%p183) target = $region32
        $region31: #{tpu_custom_call.1} parent=27 // pred_region
          %187 = dma.done %s179, 128
        $region32: #{tpu_custom_call.1} parent=27 // pred_fallthru
          _
        %s188 = sand.u32 %s70, 1
        %s189 = scalar_lea.sflag [#allocation6], %s188
        %s190 = sand.u32 %s70, 1
        %s191 = smul.addr %s190, 2
        %s192 = scalar_lea.vmem [#allocation5], %s191
        // Predicated region
        $region33: #{tpu_custom_call.1} parent=27 // pred_check
          %p193 = pneg %p83
        $region34: #{tpu_custom_call.1} parent=27 // pred_check_branch
          %195 = sbr.rel (%p193) target = $region36
        $region35: #{tpu_custom_call.1} parent=27 // pred_region
          %197 = dma.done %s189, 32
        $region36: #{tpu_custom_call.1} parent=27 // pred_fallthru
          _
        %s198 = sand.u32 %s44, 1
        %s199 = scalar_lea.sflag [#allocation3], %s198
        %s200 = sand.u32 %s44, 1
        %s201 = smul.addr %s200, 8
        %s202 = scalar_lea.vmem [#allocation2], %s201
        %p203 = pneg %p57
        %p204 = pneg %p54
        %s205 = sand.u32 %s70, 1
        %s206 = scalar_lea.sflag [#allocation6], %s205
        %s207 = sand.u32 %s70, 1
        %s208 = smul.addr %s207, 2
        %s209 = scalar_lea.vmem [#allocation5], %s208
        %p210 = pneg %p83
        %p211 = pneg %p80
        %p212 = pneg %p111
        %p213 = pneg %p108
        %s214 = sand.u32 %s98, 1
        %s215 = scalar_lea.sflag [#allocation4], %s214
        %s216 = sand.u32 %s98, 1
        %s217 = smul.addr %s216, 8
        %s218 = scalar_lea.vmem [#allocation7], %s217
        %v219 = vld [vmem:[%s182] sm:$0xff]
        %v220 = vld [vmem:[%s192] sm:$0x3]
        %v222 = vperm.slane %v220, 0
        %v223 = vperm.slane %v220, 1
        %v224 = vrot.slane %v223, 4
        %vm225 = vcmask 1043456
        %v226 = vsel %vm225, %v222, %v224
        %v228 = vmul.f32 %v219, %v226
        %229 = vst [vmem:[%s218] sm:$0xff] %v228
        %s230 = sand.u32 %s98, 1
        %s231 = scalar_lea.sflag [#allocation4], %s230
        %s232 = sand.u32 %s98, 1
        %s233 = smul.addr %s232, 8
        %s234 = scalar_lea.vmem [#allocation7], %s233
        // Predicated region
        $region37: #{tpu_custom_call.1} parent=27 // pred_check
          %p235 = pneg %p108
        $region38: #{tpu_custom_call.1} parent=27 // pred_check_branch
          %237 = sbr.rel (%p235) target = $region40
        $region39: #{tpu_custom_call.1} parent=27 // pred_region
          %239 = vsyncadd %s231, 0
          %s240 = smul.addr %s27, 2
          %s241 = smul.addr %s26, 2
          %s242 = sadd.s32 %s240, %s241
          %s243 = smul.addr %s242, 4
          %s244 = scalar_lea.hbm %s2, %s243
          %s246 = sshll.u32 %s234, 4
          %s247 = int_to_ptr.vmem [resolvable:$true] %s246
          %s248 = sshll.u32 %s244, 4
          %s249 = int_to_ptr.hbm [resolvable:$true] %s248
          %251 = dma.vmem_to_hbm [thread:$0]  %s247, 128, %s249, %s231
        $region40: #{tpu_custom_call.1} parent=27 // pred_fallthru
          _
      $region28: #{tpu_custom_call.1} parent=5 // pred_fallthru
        _
      %p252 = scmp.le.s32.totalorder 2, %s17
      // Predicated region
      $region41: #{tpu_custom_call.1} parent=5 // pred_check
        %p253 = pneg %p252
      $region42: #{tpu_custom_call.1} parent=5 // pred_check_branch
        %255 = sbr.rel (%p253) target = $region44
      $region43: #{tpu_custom_call.1} parent=5 // pred_region
        %s256 = ssub.s32 %s17, 2
        // Predicated region
        $region45: #{tpu_custom_call.1} parent=43 // pred_check
          %p257 = pneg %p114
        $region46: #{tpu_custom_call.1} parent=43 // pred_check_branch
          %259 = sbr.rel (%p257) target = $region48
        $region47: #{tpu_custom_call.1} parent=43 // pred_region
          %s260 = sand.u32 %s99, 1
          %s261 = scalar_lea.sflag [#allocation4], %s260
          %s262 = sand.u32 %s99, 1
          %s263 = smul.addr %s262, 8
          %s264 = scalar_lea.vmem [#allocation7], %s263
          %266 = dma.done %s261, 128
        $region48: #{tpu_custom_call.1} parent=43 // pred_fallthru
          _
      $region44: #{tpu_custom_call.1} parent=5 // pred_fallthru
        _
    $region6: #{tpu_custom_call.1} parent=1 // loop_footer
      %s21 = sadd.s32 1, %s17
    $region7: #{tpu_custom_call.1} parent=1 // loop_footer_branch
      %16 = sbr.rel target = $region3
    $region8: #{tpu_custom_call.1} parent=1 // loop_exit
      _
    %267 = vsyncpa [#allocation3], 1
    %s268 = scalar_lea.sflag [#allocation3], 1
    %269 = vsyncpa %s268, 1
    %270 = vsyncpa [#allocation6], 1
    %s271 = scalar_lea.sflag [#allocation6], 1
    %272 = vsyncpa %s271, 1
    %273 = vsyncpa [#allocation4], 1
    %s274 = scalar_lea.sflag [#allocation4], 1
    %275 = vsyncpa %s274, 1

</llo_original>
